<compile_context>
chip_gen: v7x
topology: tpu7x:2x2x1
jax: 0.10.0
libtpu: 0.0.40
codegen_flags: <defaults>
</compile_context>

<pallas_src>
import functools

import jax
import jax.numpy as jnp
from jax import lax
from jax.experimental import pallas as pl
from jax.experimental.pallas import tpu as pltpu


def _joint_kernel(img_ref, wf_ref, bf_ref, w1_ref, b1_ref, w2_ref, b2_ref,
                  txt_ref, wt_ref, bt_ref, lbl_ref,
                  img_logits_ref, txt_logits_ref, img_loss_ref, txt_loss_ref,
                  *, num_classes):
    f32 = jnp.float32

    # ---- image branch: Sequential(image_module, ReLU, fc1_image, ReLU, dropout, fc2_image)
    x = img_ref[...]                                                        # (bm, Din_p)
    feat = jnp.dot(x, wf_ref[...], preferred_element_type=f32) + bf_ref[...]
    feat = jnp.maximum(feat, 0.0)                                           # ReLU after image_module
    h = jnp.dot(feat, w1_ref[...], preferred_element_type=f32) + b1_ref[...]
    h = jnp.maximum(h, 0.0)                                                 # ReLU
    # dropout is identity in eval mode (see TODO at top of file)
    img_logits = jnp.dot(h, w2_ref[...], preferred_element_type=f32) + b2_ref[...]
    img_logits_ref[...] = img_logits                                        # lane-dense (bm, 128k)

    # ---- text branch: (pre-pooled) features -> linear classifier (.logits)
    txt_logits = jnp.dot(txt_ref[...], wt_ref[...], preferred_element_type=f32) + bt_ref[...]
    txt_logits_ref[...] = txt_logits

    # ---- per-row cross-entropy (mean over batch is done in the wrapper)
    bm, ncp = img_logits.shape
    lbl = lbl_ref[...]                                                      # (bm, 1) int32
    cls = lax.broadcasted_iota(jnp.int32, (bm, ncp), 1)
    col_valid = cls < num_classes                                           # mask padded classes
    pick = cls == lbl                                                       # one-hot via iota compare
    neg = jnp.float32(-1e30)

    def ce_rows(logits):
        ml = jnp.where(col_valid, logits, neg)
        m = jnp.max(ml, axis=-1, keepdims=True)                             # (bm, 1)
        lse = m + jnp.log(jnp.sum(jnp.exp(ml - m), axis=-1, keepdims=True))
        picked = jnp.sum(jnp.where(pick, logits, 0.0), axis=-1, keepdims=True)
        return lse - picked                                                 # (bm, 1)

    # Broadcast across the 128 lanes so the store is a full unmasked tile;
    # the wrapper reads lane 0.
    img_loss_ref[...] = jnp.broadcast_to(ce_rows(img_logits), (bm, ncp))
    txt_loss_ref[...] = jnp.broadcast_to(ce_rows(txt_logits), (bm, ncp))


def _round_up(x, m):
    return -(-x // m) * m


def joint_forward(img_flat, wf, bf, w1, b1, w2, b2, pooled_txt, wt, bt, labels,
                  num_classes, block_b=128):
    """Runs the fused forward. Returns (image_logits, text_logits, image_loss, text_loss)."""
    f32 = jnp.float32
    LANE = 128
    B, Din = img_flat.shape
    E = pooled_txt.shape[1]
    F = wf.shape[1]
    HID = w1.shape[1]
    NC = num_classes

    # ---- padding: lane-align every feature dim, sublane-align the batch tile.
    Din_p = _round_up(Din, LANE)
    F_p = _round_up(F, LANE)
    H_p = _round_up(HID, LANE)
    N_p = _round_up(NC, LANE)
    E_p = _round_up(E, LANE)
    bm = min(block_b, _round_up(B, 8))
    B_p = _round_up(B, bm)

    def pad2(a, rows, cols):
        return jnp.pad(a, ((0, rows - a.shape[0]), (0, cols - a.shape[1])))

    img_p = pad2(img_flat.astype(f32), B_p, Din_p)
    txt_p = pad2(pooled_txt.astype(f32), B_p, E_p)
    lbl_p = jnp.pad(labels.astype(jnp.int32).reshape(B, 1), ((0, B_p - B), (0, 0)))

    wf_p = pad2(wf.astype(f32), Din_p, F_p)
    bf_p = pad2(bf.astype(f32).reshape(1, -1), 1, F_p)
    w1_p = pad2(w1.astype(f32), F_p, H_p)
    b1_p = pad2(b1.astype(f32).reshape(1, -1), 1, H_p)
    w2_p = pad2(w2.astype(f32), H_p, N_p)
    b2_p = pad2(b2.astype(f32).reshape(1, -1), 1, N_p)
    wt_p = pad2(wt.astype(f32), E_p, N_p)
    bt_p = pad2(bt.astype(f32).reshape(1, -1), 1, N_p)

    grid = (B_p // bm,)

    def batch_map(i):
        return (i, 0)

    def const_map(i):
        return (0, 0)

    in_specs = [
        pl.BlockSpec((bm, Din_p), batch_map),     # image features (batch tiled)
        pl.BlockSpec((Din_p, F_p), const_map),    # wf  (resident)
        pl.BlockSpec((1, F_p), const_map),        # bf
        pl.BlockSpec((F_p, H_p), const_map),      # w1
        pl.BlockSpec((1, H_p), const_map),        # b1
        pl.BlockSpec((H_p, N_p), const_map),      # w2
        pl.BlockSpec((1, N_p), const_map),        # b2
        pl.BlockSpec((bm, E_p), batch_map),       # pooled text (batch tiled)
        pl.BlockSpec((E_p, N_p), const_map),      # wt
        pl.BlockSpec((1, N_p), const_map),        # bt
        pl.BlockSpec((bm, 1), batch_map),         # int labels (batch tiled)
    ]
    out_specs = (
        pl.BlockSpec((bm, N_p), batch_map),       # image logits
        pl.BlockSpec((bm, N_p), batch_map),       # text logits
        pl.BlockSpec((bm, N_p), batch_map),       # per-row image CE (lane 0)
        pl.BlockSpec((bm, N_p), batch_map),       # per-row text CE (lane 0)
    )
    out_shape = (
        jax.ShapeDtypeStruct((B_p, N_p), f32),
        jax.ShapeDtypeStruct((B_p, N_p), f32),
        jax.ShapeDtypeStruct((B_p, N_p), f32),
        jax.ShapeDtypeStruct((B_p, N_p), f32),
    )

    # Static VMEM budget: every block is double-buffered by the pipeline.
    block_elems = (bm * Din_p + Din_p * F_p + F_p + F_p * H_p + H_p
                   + H_p * N_p + N_p + bm * E_p + E_p * N_p + N_p + bm
                   + 4 * bm * N_p)
    vmem_budget = 2 * 4 * block_elems
    vmem_limit = int(min(max(2 * vmem_budget, 8 << 20), 64 << 20))

    kern = functools.partial(_joint_kernel, num_classes=NC)
    img_logits_p, txt_logits_p, img_ce_p, txt_ce_p = pl.pallas_call(
        kern,
        out_shape=out_shape,
        grid=grid,
        in_specs=in_specs,
        out_specs=out_specs,
        compiler_params=pltpu.CompilerParams(
            dimension_semantics=("parallel",),   # batch tiles shard across v7x cores
            vmem_limit_bytes=vmem_limit),
    )(img_p, wf_p, bf_p, w1_p, b1_p, w2_p, b2_p, txt_p, wt_p, bt_p, lbl_p)

    image_logits = img_logits_p[:B, :NC]
    text_logits = txt_logits_p[:B, :NC]
    image_loss = jnp.sum(img_ce_p[:B, 0]) / B
    text_loss = jnp.sum(txt_ce_p[:B, 0]) / B
    return image_logits, text_logits, image_loss, text_loss


if __name__ == "__main__":
    # Small shapes consistent with the module's forward.
    B, C, H, W = 2, 4, 16, 16          # image: NCHW
    S, E = 8, 32                       # seq len, text_feature_dim (embedding dim)
    F = 64                             # image_feature_dim
    HID = 32                           # hidden_size
    NC = 8                             # num_classes
    VOCAB = 128

    key = jax.random.PRNGKey(0)
    ks = jax.random.split(key, 12)

    # Inputs
    image = jax.random.normal(ks[0], (B, C, H, W), jnp.float32)
    input_ids = jax.random.randint(ks[1], (B, S), 0, VOCAB)
    label = jax.random.randint(ks[2], (B,), 0, NC)

    # Deterministic parameters
    Din = C * H * W
    wf = jax.random.normal(ks[3], (Din, F), jnp.float32) * 0.05   # image_module linear
    bf = jax.random.normal(ks[4], (F,), jnp.float32) * 0.1
    w1 = jax.random.normal(ks[5], (F, HID), jnp.float32) * 0.1    # fc1_image
    b1 = jax.random.normal(ks[6], (HID,), jnp.float32) * 0.1
    w2 = jax.random.normal(ks[7], (HID, NC), jnp.float32) * 0.1   # fc2_image
    b2 = jax.random.normal(ks[8], (NC,), jnp.float32) * 0.1
    emb_table = jax.random.normal(ks[9], (VOCAB, E), jnp.float32) * 0.1
    wt = jax.random.normal(ks[10], (E, NC), jnp.float32) * 0.1    # text classifier head
    bt = jax.random.normal(ks[11], (NC,), jnp.float32) * 0.1

    # Glue (reshape / embedding gather / mean-pool of the synthetic text module)
    img_flat = image.reshape(B, Din)
    # TODO(synk): per-token DMA gather not worthwhile at this size; jnp.take in glue.
    emb = jnp.take(emb_table, input_ids, axis=0)                  # (B, S, E)
    pooled = emb.mean(axis=1)                                     # (B, E) — S-reduction kept out of the kernel

    outs = joint_forward(img_flat, wf, bf, w1, b1, w2, b2, pooled, wt, bt, label,
                         num_classes=NC)
    outs = jax.block_until_ready(outs)
    image_logits, text_logits, image_loss, text_loss = outs

    # Pure-JAX reference check
    ref_feat = jnp.maximum(img_flat @ wf + bf, 0.0)
    ref_h = jnp.maximum(ref_feat @ w1 + b1, 0.0)
    ref_img_logits = ref_h @ w2 + b2
    ref_txt_logits = pooled @ wt + bt
    onehot = jax.nn.one_hot(label, NC, dtype=jnp.float32)

    def ref_ce(lg):
        return jnp.mean(jax.nn.logsumexp(lg, axis=-1) - jnp.sum(onehot * lg, axis=-1))

    assert jnp.allclose(image_logits, ref_img_logits, atol=1e-4), "image_logits mismatch"
    assert jnp.allclose(text_logits, ref_txt_logits, atol=1e-4), "text_logits mismatch"
    assert jnp.allclose(image_loss, ref_ce(ref_img_logits), atol=1e-4), "image_loss mismatch"
    assert jnp.allclose(text_loss, ref_ce(ref_txt_logits), atol=1e-4), "text_loss mismatch"

    print("KERNEL_OK")
</pallas_src>

<mosaic_0001>
module attributes {stable_mosaic.version = 11 : i64} {
  func.func @_joint_kernel(%arg0: i32, %arg1: memref<8x1024xf32, #tpu.memory_space<vmem>>, %arg2: memref<1024x128xf32, #tpu.memory_space<vmem>>, %arg3: memref<1x128xf32, #tpu.memory_space<vmem>>, %arg4: memref<128x128xf32, #tpu.memory_space<vmem>>, %arg5: memref<1x128xf32, #tpu.memory_space<vmem>>, %arg6: memref<128x128xf32, #tpu.memory_space<vmem>>, %arg7: memref<1x128xf32, #tpu.memory_space<vmem>>, %arg8: memref<8x128xf32, #tpu.memory_space<vmem>>, %arg9: memref<128x128xf32, #tpu.memory_space<vmem>>, %arg10: memref<1x128xf32, #tpu.memory_space<vmem>>, %arg11: memref<8x1xi32, #tpu.memory_space<vmem>>, %arg12: memref<8x128xf32, #tpu.memory_space<vmem>>, %arg13: memref<8x128xf32, #tpu.memory_space<vmem>>, %arg14: memref<8x128xf32, #tpu.memory_space<vmem>>, %arg15: memref<8x128xf32, #tpu.memory_space<vmem>>) attributes {dimension_semantics = [#tpu.dimension_semantics<parallel>], iteration_bounds = array<i64: 1>, scalar_prefetch = 0 : i64, scratch_operands = 0 : i64, tpu.core_type = #tpu.core_type<tc>, window_params = [{transform_indices = @transform_0, window_bounds = array<i64: 8, 1024>}, {pipeline_mode = #tpu.pipeline_mode<synchronous>, transform_indices = @transform_1, window_bounds = array<i64: 1024, 128>}, {pipeline_mode = #tpu.pipeline_mode<synchronous>, transform_indices = @transform_2, window_bounds = array<i64: 1, 128>}, {pipeline_mode = #tpu.pipeline_mode<synchronous>, transform_indices = @transform_3, window_bounds = array<i64: 128, 128>}, {pipeline_mode = #tpu.pipeline_mode<synchronous>, transform_indices = @transform_4, window_bounds = array<i64: 1, 128>}, {pipeline_mode = #tpu.pipeline_mode<synchronous>, transform_indices = @transform_5, window_bounds = array<i64: 128, 128>}, {pipeline_mode = #tpu.pipeline_mode<synchronous>, transform_indices = @transform_6, window_bounds = array<i64: 1, 128>}, {transform_indices = @transform_7, window_bounds = array<i64: 8, 128>}, {pipeline_mode = #tpu.pipeline_mode<synchronous>, transform_indices = @transform_8, window_bounds = array<i64: 128, 128>}, {pipeline_mode = #tpu.pipeline_mode<synchronous>, transform_indices = @transform_9, window_bounds = array<i64: 1, 128>}, {transform_indices = @transform_10, window_bounds = array<i64: 8, 1>}, {transform_indices = @transform_11, window_bounds = array<i64: 8, 128>}, {transform_indices = @transform_12, window_bounds = array<i64: 8, 128>}, {transform_indices = @transform_13, window_bounds = array<i64: 8, 128>}, {transform_indices = @transform_14, window_bounds = array<i64: 8, 128>}]} {
    %c0 = arith.constant 0 : index
    %c0_0 = arith.constant 0 : index
    %0 = vector.load %arg1[%c0, %c0_0] : memref<8x1024xf32, #tpu.memory_space<vmem>>, vector<8x1024xf32>
    %c0_1 = arith.constant 0 : index
    %c0_2 = arith.constant 0 : index
    %1 = vector.load %arg2[%c0_1, %c0_2] : memref<1024x128xf32, #tpu.memory_space<vmem>>, vector<1024x128xf32>
    %cst = arith.constant dense<0.000000e+00> : vector<8x128xf32>
    %2 = tpu.matmul %0, %1, %cst {dimension_numbers = #tpu.dot_dimension_numbers<[1], [0], [0], [1], [0, 0, 1, 1], [], []>} : vector<8x1024xf32>, vector<1024x128xf32>, vector<8x128xf32> -> vector<8x128xf32>
    %c0_3 = arith.constant 0 : index
    %c0_4 = arith.constant 0 : index
    %3 = vector.load %arg3[%c0_3, %c0_4] : memref<1x128xf32, #tpu.memory_space<vmem>>, vector<1x128xf32>
    %4 = vector.broadcast %3 : vector<1x128xf32> to vector<8x128xf32>
    %5 = arith.addf %2, %4 : vector<8x128xf32>
    %cst_5 = arith.constant 0.000000e+00 : f32
    %6 = vector.broadcast %cst_5 : f32 to vector<8x128xf32>
    %7 = arith.maximumf %5, %6 : vector<8x128xf32>
    %c0_6 = arith.constant 0 : index
    %c0_7 = arith.constant 0 : index
    %8 = vector.load %arg4[%c0_6, %c0_7] : memref<128x128xf32, #tpu.memory_space<vmem>>, vector<128x128xf32>
    %cst_8 = arith.constant dense<0.000000e+00> : vector<8x128xf32>
    %9 = tpu.matmul %7, %8, %cst_8 {dimension_numbers = #tpu.dot_dimension_numbers<[1], [0], [0], [1], [0, 0, 1, 1], [], []>} : vector<8x128xf32>, vector<128x128xf32>, vector<8x128xf32> -> vector<8x128xf32>
    %c0_9 = arith.constant 0 : index
    %c0_10 = arith.constant 0 : index
    %10 = vector.load %arg5[%c0_9, %c0_10] : memref<1x128xf32, #tpu.memory_space<vmem>>, vector<1x128xf32>
    %11 = vector.broadcast %10 : vector<1x128xf32> to vector<8x128xf32>
    %12 = arith.addf %9, %11 : vector<8x128xf32>
    %cst_11 = arith.constant 0.000000e+00 : f32
    %13 = vector.broadcast %cst_11 : f32 to vector<8x128xf32>
    %14 = arith.maximumf %12, %13 : vector<8x128xf32>
    %c0_12 = arith.constant 0 : index
    %c0_13 = arith.constant 0 : index
    %15 = vector.load %arg6[%c0_12, %c0_13] : memref<128x128xf32, #tpu.memory_space<vmem>>, vector<128x128xf32>
    %cst_14 = arith.constant dense<0.000000e+00> : vector<8x128xf32>
    %16 = tpu.matmul %14, %15, %cst_14 {dimension_numbers = #tpu.dot_dimension_numbers<[1], [0], [0], [1], [0, 0, 1, 1], [], []>} : vector<8x128xf32>, vector<128x128xf32>, vector<8x128xf32> -> vector<8x128xf32>
    %c0_15 = arith.constant 0 : index
    %c0_16 = arith.constant 0 : index
    %17 = vector.load %arg7[%c0_15, %c0_16] : memref<1x128xf32, #tpu.memory_space<vmem>>, vector<1x128xf32>
    %18 = vector.broadcast %17 : vector<1x128xf32> to vector<8x128xf32>
    %19 = arith.addf %16, %18 : vector<8x128xf32>
    %c0_17 = arith.constant 0 : index
    %c0_18 = arith.constant 0 : index
    %20 = vector.load %arg12[%c0_17, %c0_18] : memref<8x128xf32, #tpu.memory_space<vmem>>, vector<8x128xf32>
    tpu.vector_store %arg12[%c0_17, %c0_18], %19 {strides = array<i32>} : memref<8x128xf32, #tpu.memory_space<vmem>>, vector<8x128xf32>,
    %c0_19 = arith.constant 0 : index
    %c0_20 = arith.constant 0 : index
    %21 = vector.load %arg8[%c0_19, %c0_20] : memref<8x128xf32, #tpu.memory_space<vmem>>, vector<8x128xf32>
    %c0_21 = arith.constant 0 : index
    %c0_22 = arith.constant 0 : index
    %22 = vector.load %arg9[%c0_21, %c0_22] : memref<128x128xf32, #tpu.memory_space<vmem>>, vector<128x128xf32>
    %cst_23 = arith.constant dense<0.000000e+00> : vector<8x128xf32>
    %23 = tpu.matmul %21, %22, %cst_23 {dimension_numbers = #tpu.dot_dimension_numbers<[1], [0], [0], [1], [0, 0, 1, 1], [], []>} : vector<8x128xf32>, vector<128x128xf32>, vector<8x128xf32> -> vector<8x128xf32>
    %c0_24 = arith.constant 0 : index
    %c0_25 = arith.constant 0 : index
    %24 = vector.load %arg10[%c0_24, %c0_25] : memref<1x128xf32, #tpu.memory_space<vmem>>, vector<1x128xf32>
    %25 = vector.broadcast %24 : vector<1x128xf32> to vector<8x128xf32>
    %26 = arith.addf %23, %25 : vector<8x128xf32>
    %c0_26 = arith.constant 0 : index
    %c0_27 = arith.constant 0 : index
    %27 = vector.load %arg13[%c0_26, %c0_27] : memref<8x128xf32, #tpu.memory_space<vmem>>, vector<8x128xf32>
    tpu.vector_store %arg13[%c0_26, %c0_27], %26 {strides = array<i32>} : memref<8x128xf32, #tpu.memory_space<vmem>>, vector<8x128xf32>,
    %c0_28 = arith.constant 0 : index
    %c0_29 = arith.constant 0 : index
    %28 = vector.load %arg11[%c0_28, %c0_29] : memref<8x1xi32, #tpu.memory_space<vmem>>, vector<8x1xi32>
    %29 = tpu.iota {dimensions = array<i32: 1>} : vector<8x128xi32>
    %c8_i32 = arith.constant 8 : i32
    %30 = vector.broadcast %c8_i32 : i32 to vector<8x128xi32>
    %31 = arith.cmpi slt, %29, %30 : vector<8x128xi32>
    %32 = vector.broadcast %28 : vector<8x1xi32> to vector<8x128xi32>
    %33 = arith.cmpi eq, %29, %32 : vector<8x128xi32>
    %cst_30 = arith.constant -1.000000e+30 : f32
    %34 = vector.broadcast %cst_30 : f32 to vector<8x128xf32>
    %35 = arith.select %31, %19, %34 : vector<8x128xi1>, vector<8x128xf32>
    %cst_31 = arith.constant dense<0xFF800000> : vector<8xf32>
    %36 = vector.multi_reduction <maximumf>, %35, %cst_31 [1] : vector<8x128xf32> to vector<8xf32>
    %37 = vector.shape_cast %36 : vector<8xf32> to vector<8x1xf32>
    %38 = vector.broadcast %37 : vector<8x1xf32> to vector<8x128xf32>
    %39 = arith.subf %35, %38 : vector<8x128xf32>
    %40 = math.exp %39 : vector<8x128xf32>
    %cst_32 = arith.constant dense<0.000000e+00> : vector<8xf32>
    %41 = vector.multi_reduction <add>, %40, %cst_32 [1] : vector<8x128xf32> to vector<8xf32>
    %42 = vector.shape_cast %41 : vector<8xf32> to vector<8x1xf32>
    %43 = math.log %42 : vector<8x1xf32>
    %44 = arith.addf %37, %43 : vector<8x1xf32>
    %cst_33 = arith.constant 0.000000e+00 : f32
    %45 = vector.broadcast %cst_33 : f32 to vector<8x128xf32>
    %46 = arith.select %33, %19, %45 : vector<8x128xi1>, vector<8x128xf32>
    %cst_34 = arith.constant dense<0.000000e+00> : vector<8xf32>
    %47 = vector.multi_reduction <add>, %46, %cst_34 [1] : vector<8x128xf32> to vector<8xf32>
    %48 = vector.shape_cast %47 : vector<8xf32> to vector<8x1xf32>
    %49 = arith.subf %44, %48 : vector<8x1xf32>
    %50 = vector.shape_cast %49 : vector<8x1xf32> to vector<8x1xf32>
    %51 = vector.broadcast %50 : vector<8x1xf32> to vector<8x128xf32>
    %c0_35 = arith.constant 0 : index
    %c0_36 = arith.constant 0 : index
    %52 = vector.load %arg14[%c0_35, %c0_36] : memref<8x128xf32, #tpu.memory_space<vmem>>, vector<8x128xf32>
    tpu.vector_store %arg14[%c0_35, %c0_36], %51 {strides = array<i32>} : memref<8x128xf32, #tpu.memory_space<vmem>>, vector<8x128xf32>,
    %cst_37 = arith.constant -1.000000e+30 : f32
    %53 = vector.broadcast %cst_37 : f32 to vector<8x128xf32>
    %54 = arith.select %31, %26, %53 : vector<8x128xi1>, vector<8x128xf32>
    %cst_38 = arith.constant dense<0xFF800000> : vector<8xf32>
    %55 = vector.multi_reduction <maximumf>, %54, %cst_38 [1] : vector<8x128xf32> to vector<8xf32>
    %56 = vector.shape_cast %55 : vector<8xf32> to vector<8x1xf32>
    %57 = vector.broadcast %56 : vector<8x1xf32> to vector<8x128xf32>
    %58 = arith.subf %54, %57 : vector<8x128xf32>
    %59 = math.exp %58 : vector<8x128xf32>
    %cst_39 = arith.constant dense<0.000000e+00> : vector<8xf32>
    %60 = vector.multi_reduction <add>, %59, %cst_39 [1] : vector<8x128xf32> to vector<8xf32>
    %61 = vector.shape_cast %60 : vector<8xf32> to vector<8x1xf32>
    %62 = math.log %61 : vector<8x1xf32>
    %63 = arith.addf %56, %62 : vector<8x1xf32>
    %cst_40 = arith.constant 0.000000e+00 : f32
    %64 = vector.broadcast %cst_40 : f32 to vector<8x128xf32>
    %65 = arith.select %33, %26, %64 : vector<8x128xi1>, vector<8x128xf32>
    %cst_41 = arith.constant dense<0.000000e+00> : vector<8xf32>
    %66 = vector.multi_reduction <add>, %65, %cst_41 [1] : vector<8x128xf32> to vector<8xf32>
    %67 = vector.shape_cast %66 : vector<8xf32> to vector<8x1xf32>
    %68 = arith.subf %63, %67 : vector<8x1xf32>
    %69 = vector.shape_cast %68 : vector<8x1xf32> to vector<8x1xf32>
    %70 = vector.broadcast %69 : vector<8x1xf32> to vector<8x128xf32>
    %c0_42 = arith.constant 0 : index
    %c0_43 = arith.constant 0 : index
    %71 = vector.load %arg15[%c0_42, %c0_43] : memref<8x128xf32, #tpu.memory_space<vmem>>, vector<8x128xf32>
    tpu.vector_store %arg15[%c0_42, %c0_43], %70 {strides = array<i32>} : memref<8x128xf32, #tpu.memory_space<vmem>>, vector<8x128xf32>,
    return
  }
  func.func @transform_0(%arg0: i32) -> (i32, i32) {
    %c0_i32 = arith.constant 0 : i32
    %c0_i32_0 = arith.constant 0 : i32
    return %arg0, %c0_i32 : i32, i32
  }
  func.func @transform_1(%arg0: i32) -> (i32, i32) {
    %c0_i32 = arith.constant 0 : i32
    %c0_i32_0 = arith.constant 0 : i32
    %c0_i32_1 = arith.constant 0 : i32
    return %c0_i32, %c0_i32_0 : i32, i32
  }
  func.func @transform_2(%arg0: i32) -> (i32, i32) {
    %c0_i32 = arith.constant 0 : i32
    %c0_i32_0 = arith.constant 0 : i32
    %c0_i32_1 = arith.constant 0 : i32
    return %c0_i32, %c0_i32_0 : i32, i32
  }
  func.func @transform_3(%arg0: i32) -> (i32, i32) {
    %c0_i32 = arith.constant 0 : i32
    %c0_i32_0 = arith.constant 0 : i32
    %c0_i32_1 = arith.constant 0 : i32
    return %c0_i32, %c0_i32_0 : i32, i32
  }
  func.func @transform_4(%arg0: i32) -> (i32, i32) {
    %c0_i32 = arith.constant 0 : i32
    %c0_i32_0 = arith.constant 0 : i32
    %c0_i32_1 = arith.constant 0 : i32
    return %c0_i32, %c0_i32_0 : i32, i32
  }
  func.func @transform_5(%arg0: i32) -> (i32, i32) {
    %c0_i32 = arith.constant 0 : i32
    %c0_i32_0 = arith.constant 0 : i32
    %c0_i32_1 = arith.constant 0 : i32
    return %c0_i32, %c0_i32_0 : i32, i32
  }
  func.func @transform_6(%arg0: i32) -> (i32, i32) {
    %c0_i32 = arith.constant 0 : i32
    %c0_i32_0 = arith.constant 0 : i32
    %c0_i32_1 = arith.constant 0 : i32
    return %c0_i32, %c0_i32_0 : i32, i32
  }
  func.func @transform_7(%arg0: i32) -> (i32, i32) {
    %c0_i32 = arith.constant 0 : i32
    %c0_i32_0 = arith.constant 0 : i32
    return %arg0, %c0_i32 : i32, i32
  }
  func.func @transform_8(%arg0: i32) -> (i32, i32) {
    %c0_i32 = arith.constant 0 : i32
    %c0_i32_0 = arith.constant 0 : i32
    %c0_i32_1 = arith.constant 0 : i32
    return %c0_i32, %c0_i32_0 : i32, i32
  }
  func.func @transform_9(%arg0: i32) -> (i32, i32) {
    %c0_i32 = arith.constant 0 : i32
    %c0_i32_0 = arith.constant 0 : i32
    %c0_i32_1 = arith.constant 0 : i32
    return %c0_i32, %c0_i32_0 : i32, i32
  }
  func.func @transform_10(%arg0: i32) -> (i32, i32) {
    %c0_i32 = arith.constant 0 : i32
    %c0_i32_0 = arith.constant 0 : i32
    return %arg0, %c0_i32 : i32, i32
  }
  func.func @transform_11(%arg0: i32) -> (i32, i32) {
    %c0_i32 = arith.constant 0 : i32
    %c0_i32_0 = arith.constant 0 : i32
    return %arg0, %c0_i32 : i32, i32
  }
  func.func @transform_12(%arg0: i32) -> (i32, i32) {
    %c0_i32 = arith.constant 0 : i32
    %c0_i32_0 = arith.constant 0 : i32
    return %arg0, %c0_i32 : i32, i32
  }
  func.func @transform_13(%arg0: i32) -> (i32, i32) {
    %c0_i32 = arith.constant 0 : i32
    %c0_i32_0 = arith.constant 0 : i32
    return %arg0, %c0_i32 : i32, i32
  }
  func.func @transform_14(%arg0: i32) -> (i32, i32) {
    %c0_i32 = arith.constant 0 : i32
    %c0_i32_0 = arith.constant 0 : i32
    return %arg0, %c0_i32 : i32, i32
  }
}

</mosaic_0001>

<llo_original>
// kernel: tpu_custom_call.1
$region0: #{tpu_custom_call.1}
  #allocation0 [shape = 'u32[]', space=smem, size = 0x4, offset = 0x4, fixed_abs, tag = 'smem constant byte address 0x4 - core index']
  #allocation1 [shape = 'u32[144,128]{1,0:T(1,128)}', space=vmem, size = 0x12000, scoped, tag = 'internal scratch']
  %s0 = inlined_call_operand.hbm [shape: f32[8,1024], index: 0, kind: input, shape index: {}]
  %s1 = inlined_call_operand.hbm [shape: f32[1024,128], index: 1, kind: input, shape index: {}]
  %s2 = inlined_call_operand.vmem [shape: f32[1,128], index: 2, kind: input, shape index: {}]
  %s3 = inlined_call_operand.hbm [shape: f32[128,128], index: 3, kind: input, shape index: {}]
  %s4 = inlined_call_operand.vmem [shape: f32[1,128], index: 4, kind: input, shape index: {}]
  %s5 = inlined_call_operand.hbm [shape: f32[128,128], index: 5, kind: input, shape index: {}]
  %s6 = inlined_call_operand.vmem [shape: f32[1,128], index: 6, kind: input, shape index: {}]
  %s7 = inlined_call_operand.vmem [shape: f32[8,128], index: 7, kind: input, shape index: {}]
  %s8 = inlined_call_operand.hbm [shape: f32[128,128], index: 8, kind: input, shape index: {}]
  %s9 = inlined_call_operand.vmem [shape: f32[1,128], index: 9, kind: input, shape index: {}]
  %s10 = inlined_call_operand.vmem [shape: s32[8,1], index: 10, kind: input, shape index: {}]
  %s11 = inlined_call_operand.hbm [shape: f32[8,128], index: 11, kind: output, shape index: {0}]
  %s12 = inlined_call_operand.hbm [shape: f32[8,128], index: 12, kind: output, shape index: {1}]
  %s13 = inlined_call_operand.hbm [shape: f32[8,128], index: 13, kind: output, shape index: {2}]
  %s14 = inlined_call_operand.hbm [shape: f32[8,128], index: 14, kind: output, shape index: {3}]
  %15 = xla_tuple %s11, %s12, %s13, %s14
  %s16 = sld [smem:[#allocation0]]
  $region98: #{tpu_custom_call.1} parent=0
    _
  %s18 = ssub.s32 1, %s16
  %s19 = scalar_select 0, %s18, %s16
  $region1: #{tpu_custom_call.1} parent=0
    #allocation2 [shape = 'u8[32768]{0}', space=vmem, size = 0x8000, scoped, tag = 'input window, operand 0, single buffered']
    #allocation3 [shape = 's32[1]{0}', space=sflag, size = 0x4, scoped, tag = 'scoped memory for tpu_custom_call.1']
    #allocation4 [shape = 's32[1]{0}', space=sflag, size = 0x4, scoped, tag = 'scoped memory for tpu_custom_call.1']
    #allocation5 [shape = 'u8[524288]{0}', space=vmem, size = 0x80000, scoped, tag = 'input window, operand 1, single buffered']
    #allocation6 [shape = 's32[1]{0}', space=sflag, size = 0x4, scoped, tag = 'scoped memory for tpu_custom_call.1']
    #allocation7 [shape = 'u8[65536]{0}', space=vmem, size = 0x10000, scoped, tag = 'input window, operand 3, single buffered']
    #allocation8 [shape = 'u8[65536]{0}', space=vmem, size = 0x10000, scoped, tag = 'input window, operand 5, single buffered']
    #allocation9 [shape = 's32[1]{0}', space=sflag, size = 0x4, scoped, tag = 'scoped memory for tpu_custom_call.1']
    #allocation10 [shape = 'u8[65536]{0}', space=vmem, size = 0x10000, scoped, tag = 'input window, operand 8, single buffered']
    #allocation11 [shape = 'u8[4096]{0}', space=vmem, size = 0x1000, scoped, tag = 'output window, operand 0, single buffered']
    #allocation12 [shape = 'u8[4096]{0}', space=vmem, size = 0x1000, scoped, tag = 'output window, operand 1, single buffered']
    #allocation13 [shape = 's32[1]{0}', space=sflag, size = 0x4, scoped, tag = 'scoped memory for tpu_custom_call.1']
    #allocation14 [shape = 'u8[4096]{0}', space=vmem, size = 0x1000, scoped, tag = 'output window, operand 2, single buffered']
    #allocation15 [shape = 'u8[4096]{0}', space=vmem, size = 0x1000, scoped, tag = 'output window, operand 3, single buffered']
    #allocation16 [shape = 's32[1]{0}', space=sflag, size = 0x4, scoped, tag = 'scoped memory for tpu_custom_call.1']
    %20 = vsyncpa [#allocation3], 0
    %21 = vsyncpa [#allocation6], 0
    %22 = vsyncpa [#allocation9], 0
    %23 = vsyncpa [#allocation4], 0
    %24 = vsyncpa [#allocation13], 0
    %25 = vsyncpa [#allocation16], 0
    // Predicated region
    $region2: #{tpu_custom_call.1} parent=1 // pred_check
      _
    $region3: #{tpu_custom_call.1} parent=1 // pred_check_branch
      %27 = sbr.rel (0) target = $region5
    $region4: #{tpu_custom_call.1} parent=1 // pred_region
      %s29 = ssub.s32 1024, 1024
      %30 = vsyncadd [#allocation3], %s29
      %s32 = sshll.u32 [#allocation2], 4
      %s33 = int_to_ptr.vmem [resolvable:$true] %s32
      %35 = dma.hbm_to_vmem [thread:$0]  %s0, 1024, %s33, [#allocation3]
    $region5: #{tpu_custom_call.1} parent=1 // pred_fallthru
      _
    // Predicated region
    $region6: #{tpu_custom_call.1} parent=1 // pred_check
      _
    $region7: #{tpu_custom_call.1} parent=1 // pred_check_branch
      %37 = sbr.rel (0) target = $region9
    $region8: #{tpu_custom_call.1} parent=1 // pred_region
      %s39 = ssub.s32 16384, 16384
      %40 = vsyncadd [#allocation6], %s39
      %s41 = sshll.u32 [#allocation5], 4
      %s42 = int_to_ptr.vmem [resolvable:$true] %s41
      %47 = dma.hbm_to_vmem [thread:$0]  %s1, 16384, %s42, [#allocation6], 128, 128, 8
    $region9: #{tpu_custom_call.1} parent=1 // pred_fallthru
      _
    // Predicated region
    $region10: #{tpu_custom_call.1} parent=1 // pred_check
      _
    $region11: #{tpu_custom_call.1} parent=1 // pred_check_branch
      %49 = sbr.rel (0) target = $region13
    $region12: #{tpu_custom_call.1} parent=1 // pred_region
      _
    $region13: #{tpu_custom_call.1} parent=1 // pred_fallthru
      _
    // Predicated region
    $region14: #{tpu_custom_call.1} parent=1 // pred_check
      _
    $region15: #{tpu_custom_call.1} parent=1 // pred_check_branch
      %51 = sbr.rel (0) target = $region17
    $region16: #{tpu_custom_call.1} parent=1 // pred_region
      %s53 = ssub.s32 2048, 2048
      %54 = vsyncadd [#allocation6], %s53
      %s55 = sshll.u32 [#allocation7], 4
      %s56 = int_to_ptr.vmem [resolvable:$true] %s55
      %61 = dma.hbm_to_vmem [thread:$0]  %s3, 2048, %s56, [#allocation6], 128, 128, 8
    $region17: #{tpu_custom_call.1} parent=1 // pred_fallthru
      _
    // Predicated region
    $region18: #{tpu_custom_call.1} parent=1 // pred_check
      _
    $region19: #{tpu_custom_call.1} parent=1 // pred_check_branch
      %63 = sbr.rel (0) target = $region21
    $region20: #{tpu_custom_call.1} parent=1 // pred_region
      _
    $region21: #{tpu_custom_call.1} parent=1 // pred_fallthru
      _
    // Predicated region
    $region22: #{tpu_custom_call.1} parent=1 // pred_check
      _
    $region23: #{tpu_custom_call.1} parent=1 // pred_check_branch
      %65 = sbr.rel (0) target = $region25
    $region24: #{tpu_custom_call.1} parent=1 // pred_region
      %s67 = ssub.s32 2048, 2048
      %68 = vsyncadd [#allocation9], %s67
      %s69 = sshll.u32 [#allocation8], 4
      %s70 = int_to_ptr.vmem [resolvable:$true] %s69
      %75 = dma.hbm_to_vmem [thread:$0]  %s5, 2048, %s70, [#allocation9], 128, 128, 8
    $region25: #{tpu_custom_call.1} parent=1 // pred_fallthru
      _
    // Predicated region
    $region26: #{tpu_custom_call.1} parent=1 // pred_check
      _
    $region27: #{tpu_custom_call.1} parent=1 // pred_check_branch
      %77 = sbr.rel (0) target = $region29
    $region28: #{tpu_custom_call.1} parent=1 // pred_region
      _
    $region29: #{tpu_custom_call.1} parent=1 // pred_fallthru
      _
    // Predicated region
    $region30: #{tpu_custom_call.1} parent=1 // pred_check
      _
    $region31: #{tpu_custom_call.1} parent=1 // pred_check_branch
      %79 = sbr.rel (0) target = $region33
    $region32: #{tpu_custom_call.1} parent=1 // pred_region
      _
    $region33: #{tpu_custom_call.1} parent=1 // pred_fallthru
      _
    // Predicated region
    $region34: #{tpu_custom_call.1} parent=1 // pred_check
      _
    $region35: #{tpu_custom_call.1} parent=1 // pred_check_branch
      %81 = sbr.rel (0) target = $region37
    $region36: #{tpu_custom_call.1} parent=1 // pred_region
      %s83 = ssub.s32 2048, 2048
      %84 = vsyncadd [#allocation9], %s83
      %s85 = sshll.u32 [#allocation10], 4
      %s86 = int_to_ptr.vmem [resolvable:$true] %s85
      %91 = dma.hbm_to_vmem [thread:$0]  %s8, 2048, %s86, [#allocation9], 128, 128, 8
    $region37: #{tpu_custom_call.1} parent=1 // pred_fallthru
      _
    // Predicated region
    $region38: #{tpu_custom_call.1} parent=1 // pred_check
      _
    $region39: #{tpu_custom_call.1} parent=1 // pred_check_branch
      %93 = sbr.rel (0) target = $region41
    $region40: #{tpu_custom_call.1} parent=1 // pred_region
      _
    $region41: #{tpu_custom_call.1} parent=1 // pred_fallthru
      _
    // Predicated region
    $region42: #{tpu_custom_call.1} parent=1 // pred_check
      _
    $region43: #{tpu_custom_call.1} parent=1 // pred_check_branch
      %95 = sbr.rel (0) target = $region45
    $region44: #{tpu_custom_call.1} parent=1 // pred_region
      _
    $region45: #{tpu_custom_call.1} parent=1 // pred_fallthru
      _
    // Predicated region
    $region46: #{tpu_custom_call.1} parent=1 // pred_check
      _
    $region47: #{tpu_custom_call.1} parent=1 // pred_check_branch
      %97 = sbr.rel (0) target = $region49
    $region48: #{tpu_custom_call.1} parent=1 // pred_region
      %98 = dma.done [#allocation3], 1024
    $region49: #{tpu_custom_call.1} parent=1 // pred_fallthru
      _
    // Predicated region
    $region50: #{tpu_custom_call.1} parent=1 // pred_check
      _
    $region51: #{tpu_custom_call.1} parent=1 // pred_check_branch
      %100 = sbr.rel (0) target = $region53
    $region52: #{tpu_custom_call.1} parent=1 // pred_region
      %101 = dma.done [#allocation6], 16384
    $region53: #{tpu_custom_call.1} parent=1 // pred_fallthru
      _
    // Predicated region
    $region54: #{tpu_custom_call.1} parent=1 // pred_check
      _
    $region55: #{tpu_custom_call.1} parent=1 // pred_check_branch
      %103 = sbr.rel (0) target = $region57
    $region56: #{tpu_custom_call.1} parent=1 // pred_region
      %104 = dma.done [#allocation6], 2048
    $region57: #{tpu_custom_call.1} parent=1 // pred_fallthru
      _
    // Predicated region
    $region58: #{tpu_custom_call.1} parent=1 // pred_check
      _
    $region59: #{tpu_custom_call.1} parent=1 // pred_check_branch
      %106 = sbr.rel (0) target = $region61
    $region60: #{tpu_custom_call.1} parent=1 // pred_region
      %107 = dma.done [#allocation9], 2048
    $region61: #{tpu_custom_call.1} parent=1 // pred_fallthru
      _
    // Predicated region
    $region62: #{tpu_custom_call.1} parent=1 // pred_check
      _
    $region63: #{tpu_custom_call.1} parent=1 // pred_check_branch
      %109 = sbr.rel (0) target = $region65
    $region64: #{tpu_custom_call.1} parent=1 // pred_region
      %110 = dma.done [#allocation9], 2048
    $region65: #{tpu_custom_call.1} parent=1 // pred_fallthru
      _
    %v111 = vld [vmem:[#allocation2] sm:$0xff]
    %v112 = vld [vmem:[#allocation2 + $0x8] sm:$0xff]
    %v113 = vld [vmem:[#allocation2 + $0x10] sm:$0xff]
    %v114 = vld [vmem:[#allocation2 + $0x18] sm:$0xff]
    %v115 = vld [vmem:[#allocation2 + $0x20] sm:$0xff]
    %v116 = vld [vmem:[#allocation2 + $0x28] sm:$0xff]
    %v117 = vld [vmem:[#allocation2 + $0x30] sm:$0xff]
    %v118 = vld [vmem:[#allocation2 + $0x38] sm:$0xff]
    %v119 = vld [vmem:[#allocation5] sm:$0xff]
    %v120 = vld [vmem:[#allocation5 + $0x8] sm:$0xff]
    %v121 = vld [vmem:[#allocation5 + $0x10] sm:$0xff]
    %v122 = vld [vmem:[#allocation5 + $0x18] sm:$0xff]
    %v123 = vld [vmem:[#allocation5 + $0x20] sm:$0xff]
    %v124 = vld [vmem:[#allocation5 + $0x28] sm:$0xff]
    %v125 = vld [vmem:[#allocation5 + $0x30] sm:$0xff]
    %v126 = vld [vmem:[#allocation5 + $0x38] sm:$0xff]
    %v127 = vld [vmem:[#allocation5 + $0x40] sm:$0xff]
    %v128 = vld [vmem:[#allocation5 + $0x48] sm:$0xff]
    %v129 = vld [vmem:[#allocation5 + $0x50] sm:$0xff]
    %v130 = vld [vmem:[#allocation5 + $0x58] sm:$0xff]
    %v131 = vld [vmem:[#allocation5 + $0x60] sm:$0xff]
    %v132 = vld [vmem:[#allocation5 + $0x68] sm:$0xff]
    %v133 = vld [vmem:[#allocation5 + $0x70] sm:$0xff]
    %v134 = vld [vmem:[#allocation5 + $0x78] sm:$0xff]
    %v135 = vld [vmem:[#allocation5 + $0x80] sm:$0xff]
    %v136 = vld [vmem:[#allocation5 + $0x88] sm:$0xff]
    %v137 = vld [vmem:[#allocation5 + $0x90] sm:$0xff]
    %v138 = vld [vmem:[#allocation5 + $0x98] sm:$0xff]
    %v139 = vld [vmem:[#allocation5 + $0xa0] sm:$0xff]
    %v140 = vld [vmem:[#allocation5 + $0xa8] sm:$0xff]
    %v141 = vld [vmem:[#allocation5 + $0xb0] sm:$0xff]
    %v142 = vld [vmem:[#allocation5 + $0xb8] sm:$0xff]
    %v143 = vld [vmem:[#allocation5 + $0xc0] sm:$0xff]
    %v144 = vld [vmem:[#allocation5 + $0xc8] sm:$0xff]
    %v145 = vld [vmem:[#allocation5 + $0xd0] sm:$0xff]
    %v146 = vld [vmem:[#allocation5 + $0xd8] sm:$0xff]
    %v147 = vld [vmem:[#allocation5 + $0xe0] sm:$0xff]
    %v148 = vld [vmem:[#allocation5 + $0xe8] sm:$0xff]
    %v149 = vld [vmem:[#allocation5 + $0xf0] sm:$0xff]
    %v150 = vld [vmem:[#allocation5 + $0xf8] sm:$0xff]
    %v151 = vld [vmem:[#allocation5 + $0x100] sm:$0xff]
    %v152 = vld [vmem:[#allocation5 + $0x108] sm:$0xff]
    %v153 = vld [vmem:[#allocation5 + $0x110] sm:$0xff]
    %v154 = vld [vmem:[#allocation5 + $0x118] sm:$0xff]
    %v155 = vld [vmem:[#allocation5 + $0x120] sm:$0xff]
    %v156 = vld [vmem:[#allocation5 + $0x128] sm:$0xff]
    %v157 = vld [vmem:[#allocation5 + $0x130] sm:$0xff]
    %v158 = vld [vmem:[#allocation5 + $0x138] sm:$0xff]
    %v159 = vld [vmem:[#allocation5 + $0x140] sm:$0xff]
    %v160 = vld [vmem:[#allocation5 + $0x148] sm:$0xff]
    %v161 = vld [vmem:[#allocation5 + $0x150] sm:$0xff]
    %v162 = vld [vmem:[#allocation5 + $0x158] sm:$0xff]
    %v163 = vld [vmem:[#allocation5 + $0x160] sm:$0xff]
    %v164 = vld [vmem:[#allocation5 + $0x168] sm:$0xff]
    %v165 = vld [vmem:[#allocation5 + $0x170] sm:$0xff]
    %v166 = vld [vmem:[#allocation5 + $0x178] sm:$0xff]
    %v167 = vld [vmem:[#allocation5 + $0x180] sm:$0xff]
    %v168 = vld [vmem:[#allocation5 + $0x188] sm:$0xff]
    %v169 = vld [vmem:[#allocation5 + $0x190] sm:$0xff]
    %v170 = vld [vmem:[#allocation5 + $0x198] sm:$0xff]
    %v171 = vld [vmem:[#allocation5 + $0x1a0] sm:$0xff]
    %v172 = vld [vmem:[#allocation5 + $0x1a8] sm:$0xff]
    %v173 = vld [vmem:[#allocation5 + $0x1b0] sm:$0xff]
    %v174 = vld [vmem:[#allocation5 + $0x1b8] sm:$0xff]
    %v175 = vld [vmem:[#allocation5 + $0x1c0] sm:$0xff]
    %v176 = vld [vmem:[#allocation5 + $0x1c8] sm:$0xff]
    %v177 = vld [vmem:[#allocation5 + $0x1d0] sm:$0xff]
    %v178 = vld [vmem:[#allocation5 + $0x1d8] sm:$0xff]
    %v179 = vld [vmem:[#allocation5 + $0x1e0] sm:$0xff]
    %v180 = vld [vmem:[#allocation5 + $0x1e8] sm:$0xff]
    %v181 = vld [vmem:[#allocation5 + $0x1f0] sm:$0xff]
    %v182 = vld [vmem:[#allocation5 + $0x1f8] sm:$0xff]
    %v183 = vld [vmem:[#allocation5 + $0x200] sm:$0xff]
    %v184 = vld [vmem:[#allocation5 + $0x208] sm:$0xff]
    %v185 = vld [vmem:[#allocation5 + $0x210] sm:$0xff]
    %v186 = vld [vmem:[#allocation5 + $0x218] sm:$0xff]
    %v187 = vld [vmem:[#allocation5 + $0x220] sm:$0xff]
    %v188 = vld [vmem:[#allocation5 + $0x228] sm:$0xff]
    %v189 = vld [vmem:[#allocation5 + $0x230] sm:$0xff]
    %v190 = vld [vmem:[#allocation5 + $0x238] sm:$0xff]
    %v191 = vld [vmem:[#allocation5 + $0x240] sm:$0xff]
    %v192 = vld [vmem:[#allocation5 + $0x248] sm:$0xff]
    %v193 = vld [vmem:[#allocation5 + $0x250] sm:$0xff]
    %v194 = vld [vmem:[#allocation5 + $0x258] sm:$0xff]
    %v195 = vld [vmem:[#allocation5 + $0x260] sm:$0xff]
    %v196 = vld [vmem:[#allocation5 + $0x268] sm:$0xff]
    %v197 = vld [vmem:[#allocation5 + $0x270] sm:$0xff]
    %v198 = vld [vmem:[#allocation5 + $0x278] sm:$0xff]
    %v199 = vld [vmem:[#allocation5 + $0x280] sm:$0xff]
    %v200 = vld [vmem:[#allocation5 + $0x288] sm:$0xff]
    %v201 = vld [vmem:[#allocation5 + $0x290] sm:$0xff]
    %v202 = vld [vmem:[#allocation5 + $0x298] sm:$0xff]
    %v203 = vld [vmem:[#allocation5 + $0x2a0] sm:$0xff]
    %v204 = vld [vmem:[#allocation5 + $0x2a8] sm:$0xff]
    %v205 = vld [vmem:[#allocation5 + $0x2b0] sm:$0xff]
    %v206 = vld [vmem:[#allocation5 + $0x2b8] sm:$0xff]
    %v207 = vld [vmem:[#allocation5 + $0x2c0] sm:$0xff]
    %v208 = vld [vmem:[#allocation5 + $0x2c8] sm:$0xff]
    %v209 = vld [vmem:[#allocation5 + $0x2d0] sm:$0xff]
    %v210 = vld [vmem:[#allocation5 + $0x2d8] sm:$0xff]
    %v211 = vld [vmem:[#allocation5 + $0x2e0] sm:$0xff]
    %v212 = vld [vmem:[#allocation5 + $0x2e8] sm:$0xff]
    %v213 = vld [vmem:[#allocation5 + $0x2f0] sm:$0xff]
    %v214 = vld [vmem:[#allocation5 + $0x2f8] sm:$0xff]
    %v215 = vld [vmem:[#allocation5 + $0x300] sm:$0xff]
    %v216 = vld [vmem:[#allocation5 + $0x308] sm:$0xff]
    %v217 = vld [vmem:[#allocation5 + $0x310] sm:$0xff]
    %v218 = vld [vmem:[#allocation5 + $0x318] sm:$0xff]
    %v219 = vld [vmem:[#allocation5 + $0x320] sm:$0xff]
    %v220 = vld [vmem:[#allocation5 + $0x328] sm:$0xff]
    %v221 = vld [vmem:[#allocation5 + $0x330] sm:$0xff]
    %v222 = vld [vmem:[#allocation5 + $0x338] sm:$0xff]
    %v223 = vld [vmem:[#allocation5 + $0x340] sm:$0xff]
    %v224 = vld [vmem:[#allocation5 + $0x348] sm:$0xff]
    %v225 = vld [vmem:[#allocation5 + $0x350] sm:$0xff]
    %v226 = vld [vmem:[#allocation5 + $0x358] sm:$0xff]
    %v227 = vld [vmem:[#allocation5 + $0x360] sm:$0xff]
    %v228 = vld [vmem:[#allocation5 + $0x368] sm:$0xff]
    %v229 = vld [vmem:[#allocation5 + $0x370] sm:$0xff]
    %v230 = vld [vmem:[#allocation5 + $0x378] sm:$0xff]
    %v231 = vld [vmem:[#allocation5 + $0x380] sm:$0xff]
    %v232 = vld [vmem:[#allocation5 + $0x388] sm:$0xff]
    %v233 = vld [vmem:[#allocation5 + $0x390] sm:$0xff]
    %v234 = vld [vmem:[#allocation5 + $0x398] sm:$0xff]
    %v235 = vld [vmem:[#allocation5 + $0x3a0] sm:$0xff]
    %v236 = vld [vmem:[#allocation5 + $0x3a8] sm:$0xff]
    %v237 = vld [vmem:[#allocation5 + $0x3b0] sm:$0xff]
    %v238 = vld [vmem:[#allocation5 + $0x3b8] sm:$0xff]
    %v239 = vld [vmem:[#allocation5 + $0x3c0] sm:$0xff]
    %v240 = vld [vmem:[#allocation5 + $0x3c8] sm:$0xff]
    %v241 = vld [vmem:[#allocation5 + $0x3d0] sm:$0xff]
    %v242 = vld [vmem:[#allocation5 + $0x3d8] sm:$0xff]
    %v243 = vld [vmem:[#allocation5 + $0x3e0] sm:$0xff]
    %v244 = vld [vmem:[#allocation5 + $0x3e8] sm:$0xff]
    %v245 = vld [vmem:[#allocation5 + $0x3f0] sm:$0xff]
    %v246 = vld [vmem:[#allocation5 + $0x3f8] sm:$0xff]
    %v247 = vld [vmem:[%s2] sm:$0x1]
    %v249 = vlaneseq
    %v250 = vshrl.u32 %v249, 7
    %v251 = vsub.s32 0, %v250
    %v252 = vrot.slane %v247, %v251
    %254 = vmatprep.subr.mxu0 0.0
    %255 = vmatpush1.msra.mxu0 %v119
    %256 = vmatprep.subr.mxu0 0.0
    %257 = vmatpush1.msra.mxu0 %v120
    %258 = vmatprep.subr.mxu0 0.0
    %259 = vmatpush1.msra.mxu0 %v121
    %260 = vmatprep.subr.mxu0 0.0
    %261 = vmatpush1.msra.mxu0 %v122
    %262 = vmatprep.subr.mxu0 0.0
    %263 = vmatpush1.msra.mxu0 %v123
    %264 = vmatprep.subr.mxu0 0.0
    %265 = vmatpush1.msra.mxu0 %v124
    %266 = vmatprep.subr.mxu0 0.0
    %267 = vmatpush1.msra.mxu0 %v125
    %268 = vmatprep.subr.mxu0 0.0
    %269 = vmatpush1.msra.mxu0 %v126
    %270 = vmatprep.subr.mxu0 0.0
    %271 = vmatpush1.msra.mxu0 %v127
    %272 = vmatprep.subr.mxu0 0.0
    %273 = vmatpush1.msra.mxu0 %v128
    %274 = vmatprep.subr.mxu0 0.0
    %275 = vmatpush1.msra.mxu0 %v129
    %276 = vmatprep.subr.mxu0 0.0
    %277 = vmatpush1.msra.mxu0 %v130
    %278 = vmatprep.subr.mxu0 0.0
    %279 = vmatpush1.msra.mxu0 %v131
    %280 = vmatprep.subr.mxu0 0.0
    %281 = vmatpush1.msra.mxu0 %v132
    %282 = vmatprep.subr.mxu0 0.0
    %283 = vmatpush1.msra.mxu0 %v133
    %284 = vmatprep.subr.mxu0 0.0
    %285 = vmatpush1.msra.mxu0 %v134
    %286 = vmatprep.subr.mxu0 0.0
    %287 = vmatpush1.msra.mxu0 %v135
    %288 = vmatprep.subr.mxu0 0.0
    %289 = vmatpush1.msra.mxu0 %v136
    %290 = vmatprep.subr.mxu0 0.0
    %291 = vmatpush1.msra.mxu0 %v137
    %292 = vmatprep.subr.mxu0 0.0
    %293 = vmatpush1.msra.mxu0 %v138
    %294 = vmatprep.subr.mxu0 0.0
    %295 = vmatpush1.msra.mxu0 %v139
    %296 = vmatprep.subr.mxu0 0.0
    %297 = vmatpush1.msra.mxu0 %v140
    %298 = vmatprep.subr.mxu0 0.0
    %299 = vmatpush1.msra.mxu0 %v141
    %300 = vmatprep.subr.mxu0 0.0
    %301 = vmatpush1.msra.mxu0 %v142
    %302 = vmatprep.subr.mxu0 0.0
    %303 = vmatpush1.msra.mxu0 %v143
    %304 = vmatprep.subr.mxu0 0.0
    %305 = vmatpush1.msra.mxu0 %v144
    %306 = vmatprep.subr.mxu0 0.0
    %307 = vmatpush1.msra.mxu0 %v145
    %308 = vmatprep.subr.mxu0 0.0
    %309 = vmatpush1.msra.mxu0 %v146
    %310 = vmatprep.subr.mxu0 0.0
    %311 = vmatpush1.msra.mxu0 %v147
    %312 = vmatprep.subr.mxu0 0.0
    %313 = vmatpush1.msra.mxu0 %v148
    %314 = vmatprep.subr.mxu0 0.0
    %315 = vmatpush1.msra.mxu0 %v149
    %316 = vmatprep.subr.mxu0 0.0
    %317 = vmatpush1.msra.mxu0 %v150
    %318 = vmatprep.mubr.f32.mxu0 %v112
    %319 = vmatmul.mubr.f32.gmra.mrb[0].mxu0 %v111
    %v320 = vpop.f32.mrb[0].mxu0
    %v321 = vadd.f32 %v252, %v320
    %v322 = vpop.f32.mrb[0].mxu0
    %323 = vdwg.mxu0
    %324 = vmatprep.subr.mxu0 0.0
    %325 = vmatpush1.msra.mxu0 %v151
    %326 = vmatprep.subr.mxu0 0.0
    %327 = vmatpush1.msra.mxu0 %v152
    %328 = vmatprep.subr.mxu0 0.0
    %329 = vmatpush1.msra.mxu0 %v153
    %330 = vmatprep.subr.mxu0 0.0
    %331 = vmatpush1.msra.mxu0 %v154
    %332 = vmatprep.subr.mxu0 0.0
    %333 = vmatpush1.msra.mxu0 %v155
    %334 = vmatprep.subr.mxu0 0.0
    %335 = vmatpush1.msra.mxu0 %v156
    %336 = vmatprep.subr.mxu0 0.0
    %337 = vmatpush1.msra.mxu0 %v157
    %338 = vmatprep.subr.mxu0 0.0
    %339 = vmatpush1.msra.mxu0 %v158
    %340 = vmatprep.subr.mxu0 0.0
    %341 = vmatpush1.msra.mxu0 %v159
    %342 = vmatprep.subr.mxu0 0.0
    %343 = vmatpush1.msra.mxu0 %v160
    %344 = vmatprep.subr.mxu0 0.0
    %345 = vmatpush1.msra.mxu0 %v161
    %346 = vmatprep.subr.mxu0 0.0
    %347 = vmatpush1.msra.mxu0 %v162
    %348 = vmatprep.subr.mxu0 0.0
    %349 = vmatpush1.msra.mxu0 %v163
    %350 = vmatprep.subr.mxu0 0.0
    %351 = vmatpush1.msra.mxu0 %v164
    %352 = vmatprep.subr.mxu0 0.0
    %353 = vmatpush1.msra.mxu0 %v165
    %354 = vmatprep.subr.mxu0 0.0
    %355 = vmatpush1.msra.mxu0 %v166
    %356 = vmatprep.subr.mxu0 0.0
    %357 = vmatpush1.msra.mxu0 %v167
    %358 = vmatprep.subr.mxu0 0.0
    %359 = vmatpush1.msra.mxu0 %v168
    %360 = vmatprep.subr.mxu0 0.0
    %361 = vmatpush1.msra.mxu0 %v169
    %362 = vmatprep.subr.mxu0 0.0
    %363 = vmatpush1.msra.mxu0 %v170
    %364 = vmatprep.subr.mxu0 0.0
    %365 = vmatpush1.msra.mxu0 %v171
    %366 = vmatprep.subr.mxu0 0.0
    %367 = vmatpush1.msra.mxu0 %v172
    %368 = vmatprep.subr.mxu0 0.0
    %369 = vmatpush1.msra.mxu0 %v173
    %370 = vmatprep.subr.mxu0 0.0
    %371 = vmatpush1.msra.mxu0 %v174
    %372 = vmatprep.subr.mxu0 0.0
    %373 = vmatpush1.msra.mxu0 %v175
    %374 = vmatprep.subr.mxu0 0.0
    %375 = vmatpush1.msra.mxu0 %v176
    %376 = vmatprep.subr.mxu0 0.0
    %377 = vmatpush1.msra.mxu0 %v177
    %378 = vmatprep.subr.mxu0 0.0
    %379 = vmatpush1.msra.mxu0 %v178
    %380 = vmatprep.subr.mxu0 0.0
    %381 = vmatpush1.msra.mxu0 %v179
    %382 = vmatprep.subr.mxu0 0.0
    %383 = vmatpush1.msra.mxu0 %v180
    %384 = vmatprep.subr.mxu0 0.0
    %385 = vmatpush1.msra.mxu0 %v181
    %386 = vmatprep.subr.mxu0 0.0
    %387 = vmatpush1.msra.mxu0 %v182
    %388 = vmatprep.mubr.f32.mxu0 %v114
    %389 = vmatmul.mubr.f32.gmra.mrb[0].mxu0 %v113
    %v390 = vpop.f32.mrb[0].mxu0
    %v391 = vadd.f32 %v321, %v390
    %v392 = vpop.f32.mrb[0].mxu0
    %393 = vdwg.mxu0
    %394 = vmatprep.subr.mxu0 0.0
    %395 = vmatpush1.msra.mxu0 %v183
    %396 = vmatprep.subr.mxu0 0.0
    %397 = vmatpush1.msra.mxu0 %v184
    %398 = vmatprep.subr.mxu0 0.0
    %399 = vmatpush1.msra.mxu0 %v185
    %400 = vmatprep.subr.mxu0 0.0
    %401 = vmatpush1.msra.mxu0 %v186
    %402 = vmatprep.subr.mxu0 0.0
    %403 = vmatpush1.msra.mxu0 %v187
    %404 = vmatprep.subr.mxu0 0.0
    %405 = vmatpush1.msra.mxu0 %v188
    %406 = vmatprep.subr.mxu0 0.0
    %407 = vmatpush1.msra.mxu0 %v189
    %408 = vmatprep.subr.mxu0 0.0
    %409 = vmatpush1.msra.mxu0 %v190
    %410 = vmatprep.subr.mxu0 0.0
    %411 = vmatpush1.msra.mxu0 %v191
    %412 = vmatprep.subr.mxu0 0.0
    %413 = vmatpush1.msra.mxu0 %v192
    %414 = vmatprep.subr.mxu0 0.0
    %415 = vmatpush1.msra.mxu0 %v193
    %416 = vmatprep.subr.mxu0 0.0
    %417 = vmatpush1.msra.mxu0 %v194
    %418 = vmatprep.subr.mxu0 0.0
    %419 = vmatpush1.msra.mxu0 %v195
    %420 = vmatprep.subr.mxu0 0.0
    %421 = vmatpush1.msra.mxu0 %v196
    %422 = vmatprep.subr.mxu0 0.0
    %423 = vmatpush1.msra.mxu0 %v197
    %424 = vmatprep.subr.mxu0 0.0
    %425 = vmatpush1.msra.mxu0 %v198
    %426 = vmatprep.subr.mxu0 0.0
    %427 = vmatpush1.msra.mxu0 %v199
    %428 = vmatprep.subr.mxu0 0.0
    %429 = vmatpush1.msra.mxu0 %v200
    %430 = vmatprep.subr.mxu0 0.0
    %431 = vmatpush1.msra.mxu0 %v201
    %432 = vmatprep.subr.mxu0 0.0
    %433 = vmatpush1.msra.mxu0 %v202
    %434 = vmatprep.subr.mxu0 0.0
    %435 = vmatpush1.msra.mxu0 %v203
    %436 = vmatprep.subr.mxu0 0.0
    %437 = vmatpush1.msra.mxu0 %v204
    %438 = vmatprep.subr.mxu0 0.0
    %439 = vmatpush1.msra.mxu0 %v205
    %440 = vmatprep.subr.mxu0 0.0
    %441 = vmatpush1.msra.mxu0 %v206
    %442 = vmatprep.subr.mxu0 0.0
    %443 = vmatpush1.msra.mxu0 %v207
    %444 = vmatprep.subr.mxu0 0.0
    %445 = vmatpush1.msra.mxu0 %v208
    %446 = vmatprep.subr.mxu0 0.0
    %447 = vmatpush1.msra.mxu0 %v209
    %448 = vmatprep.subr.mxu0 0.0
    %449 = vmatpush1.msra.mxu0 %v210
    %450 = vmatprep.subr.mxu0 0.0
    %451 = vmatpush1.msra.mxu0 %v211
    %452 = vmatprep.subr.mxu0 0.0
    %453 = vmatpush1.msra.mxu0 %v212
    %454 = vmatprep.subr.mxu0 0.0
    %455 = vmatpush1.msra.mxu0 %v213
    %456 = vmatprep.subr.mxu0 0.0
    %457 = vmatpush1.msra.mxu0 %v214
    %458 = vmatprep.mubr.f32.mxu0 %v116
    %459 = vmatmul.mubr.f32.gmra.mrb[0].mxu0 %v115
    %v460 = vpop.f32.mrb[0].mxu0
    %v461 = vadd.f32 %v391, %v460
    %v462 = vpop.f32.mrb[0].mxu0
    %463 = vdwg.mxu0
    %464 = vmatprep.subr.mxu0 0.0
    %465 = vmatpush1.msra.mxu0 %v215
    %466 = vmatprep.subr.mxu0 0.0
    %467 = vmatpush1.msra.mxu0 %v216
    %468 = vmatprep.subr.mxu0 0.0
    %469 = vmatpush1.msra.mxu0 %v217
    %470 = vmatprep.subr.mxu0 0.0
    %471 = vmatpush1.msra.mxu0 %v218
    %472 = vmatprep.subr.mxu0 0.0
    %473 = vmatpush1.msra.mxu0 %v219
    %474 = vmatprep.subr.mxu0 0.0
    %475 = vmatpush1.msra.mxu0 %v220
    %476 = vmatprep.subr.mxu0 0.0
    %477 = vmatpush1.msra.mxu0 %v221
    %478 = vmatprep.subr.mxu0 0.0
    %479 = vmatpush1.msra.mxu0 %v222
    %480 = vmatprep.subr.mxu0 0.0
    %481 = vmatpush1.msra.mxu0 %v223
    %482 = vmatprep.subr.mxu0 0.0
    %483 = vmatpush1.msra.mxu0 %v224
    %484 = vmatprep.subr.mxu0 0.0
    %485 = vmatpush1.msra.mxu0 %v225
    %486 = vmatprep.subr.mxu0 0.0
    %487 = vmatpush1.msra.mxu0 %v226
    %488 = vmatprep.subr.mxu0 0.0
    %489 = vmatpush1.msra.mxu0 %v227
    %490 = vmatprep.subr.mxu0 0.0
    %491 = vmatpush1.msra.mxu0 %v228
    %492 = vmatprep.subr.mxu0 0.0
    %493 = vmatpush1.msra.mxu0 %v229
    %494 = vmatprep.subr.mxu0 0.0
    %495 = vmatpush1.msra.mxu0 %v230
    %496 = vmatprep.subr.mxu0 0.0
    %497 = vmatpush1.msra.mxu0 %v231
    %498 = vmatprep.subr.mxu0 0.0
    %499 = vmatpush1.msra.mxu0 %v232
    %500 = vmatprep.subr.mxu0 0.0
    %501 = vmatpush1.msra.mxu0 %v233
    %502 = vmatprep.subr.mxu0 0.0
    %503 = vmatpush1.msra.mxu0 %v234
    %504 = vmatprep.subr.mxu0 0.0
    %505 = vmatpush1.msra.mxu0 %v235
    %506 = vmatprep.subr.mxu0 0.0
    %507 = vmatpush1.msra.mxu0 %v236
    %508 = vmatprep.subr.mxu0 0.0
    %509 = vmatpush1.msra.mxu0 %v237
    %510 = vmatprep.subr.mxu0 0.0
    %511 = vmatpush1.msra.mxu0 %v238
    %512 = vmatprep.subr.mxu0 0.0
    %513 = vmatpush1.msra.mxu0 %v239
    %514 = vmatprep.subr.mxu0 0.0
    %515 = vmatpush1.msra.mxu0 %v240
    %516 = vmatprep.subr.mxu0 0.0
    %517 = vmatpush1.msra.mxu0 %v241
    %518 = vmatprep.subr.mxu0 0.0
    %519 = vmatpush1.msra.mxu0 %v242
    %520 = vmatprep.subr.mxu0 0.0
    %521 = vmatpush1.msra.mxu0 %v243
    %522 = vmatprep.subr.mxu0 0.0
    %523 = vmatpush1.msra.mxu0 %v244
    %524 = vmatprep.subr.mxu0 0.0
    %525 = vmatpush1.msra.mxu0 %v245
    %526 = vmatprep.subr.mxu0 0.0
    %527 = vmatpush1.msra.mxu0 %v246
    %528 = vmatprep.mubr.f32.mxu0 %v118
    %529 = vmatmul.mubr.f32.gmra.mrb[0].mxu0 %v117
    %v530 = vpop.f32.mrb[0].mxu0
    %v531 = vadd.f32 %v461, %v530
    %v532 = vpop.f32.mrb[0].mxu0
    %533 = vdwg.mxu0
    %v534 = vmax.f32 %v531, 0.0
    %v535 = vld [vmem:[#allocation7] sm:$0xff]
    %v536 = vld [vmem:[#allocation7 + $0x8] sm:$0xff]
    %v537 = vld [vmem:[#allocation7 + $0x10] sm:$0xff]
    %v538 = vld [vmem:[#allocation7 + $0x18] sm:$0xff]
    %v539 = vld [vmem:[#allocation7 + $0x20] sm:$0xff]
    %v540 = vld [vmem:[#allocation7 + $0x28] sm:$0xff]
    %v541 = vld [vmem:[#allocation7 + $0x30] sm:$0xff]
    %v542 = vld [vmem:[#allocation7 + $0x38] sm:$0xff]
    %v543 = vld [vmem:[#allocation7 + $0x40] sm:$0xff]
    %v544 = vld [vmem:[#allocation7 + $0x48] sm:$0xff]
    %v545 = vld [vmem:[#allocation7 + $0x50] sm:$0xff]
    %v546 = vld [vmem:[#allocation7 + $0x58] sm:$0xff]
    %v547 = vld [vmem:[#allocation7 + $0x60] sm:$0xff]
    %v548 = vld [vmem:[#allocation7 + $0x68] sm:$0xff]
    %v549 = vld [vmem:[#allocation7 + $0x70] sm:$0xff]
    %v550 = vld [vmem:[#allocation7 + $0x78] sm:$0xff]
    %v551 = vld [vmem:[%s4] sm:$0x1]
    %v553 = vlaneseq
    %v554 = vshrl.u32 %v553, 7
    %v555 = vsub.s32 0, %v554
    %v556 = vrot.slane %v551, %v555
    %558 = vmatprep.subr.mxu0 0.0
    %559 = vmatpush1.msra.mxu0 %v535
    %560 = vmatprep.subr.mxu0 0.0
    %561 = vmatpush1.msra.mxu0 %v536
    %562 = vmatprep.subr.mxu0 0.0
    %563 = vmatpush1.msra.mxu0 %v537
    %564 = vmatprep.subr.mxu0 0.0
    %565 = vmatpush1.msra.mxu0 %v538
    %566 = vmatprep.subr.mxu0 0.0
    %567 = vmatpush1.msra.mxu0 %v539
    %568 = vmatprep.subr.mxu0 0.0
    %569 = vmatpush1.msra.mxu0 %v540
    %570 = vmatprep.subr.mxu0 0.0
    %571 = vmatpush1.msra.mxu0 %v541
    %572 = vmatprep.subr.mxu0 0.0
    %573 = vmatpush1.msra.mxu0 %v542
    %574 = vmatprep.subr.mxu0 0.0
    %575 = vmatpush1.msra.mxu0 %v543
    %576 = vmatprep.subr.mxu0 0.0
    %577 = vmatpush1.msra.mxu0 %v544
    %578 = vmatprep.subr.mxu0 0.0
    %579 = vmatpush1.msra.mxu0 %v545
    %580 = vmatprep.subr.mxu0 0.0
    %581 = vmatpush1.msra.mxu0 %v546
    %582 = vmatprep.subr.mxu0 0.0
    %583 = vmatpush1.msra.mxu0 %v547
    %584 = vmatprep.subr.mxu0 0.0
    %585 = vmatpush1.msra.mxu0 %v548
    %586 = vmatprep.subr.mxu0 0.0
    %587 = vmatpush1.msra.mxu0 %v549
    %588 = vmatprep.subr.mxu0 0.0
    %589 = vmatpush1.msra.mxu0 %v550
    %590 = vmatprep.subr.mxu0 0.0
    %591 = vmatpush1.msra.mxu0 0.0
    %592 = vmatprep.subr.mxu0 0.0
    %593 = vmatpush1.msra.mxu0 0.0
    %594 = vmatprep.subr.mxu0 0.0
    %595 = vmatpush1.msra.mxu0 0.0
    %596 = vmatprep.subr.mxu0 0.0
    %597 = vmatpush1.msra.mxu0 0.0
    %598 = vmatprep.subr.mxu0 0.0
    %599 = vmatpush1.msra.mxu0 0.0
    %600 = vmatprep.subr.mxu0 0.0
    %601 = vmatpush1.msra.mxu0 0.0
    %602 = vmatprep.subr.mxu0 0.0
    %603 = vmatpush1.msra.mxu0 0.0
    %604 = vmatprep.subr.mxu0 0.0
    %605 = vmatpush1.msra.mxu0 0.0
    %606 = vmatprep.subr.mxu0 0.0
    %607 = vmatpush1.msra.mxu0 0.0
    %608 = vmatprep.subr.mxu0 0.0
    %609 = vmatpush1.msra.mxu0 0.0
    %610 = vmatprep.subr.mxu0 0.0
    %611 = vmatpush1.msra.mxu0 0.0
    %612 = vmatprep.subr.mxu0 0.0
    %613 = vmatpush1.msra.mxu0 0.0
    %614 = vmatprep.subr.mxu0 0.0
    %615 = vmatpush1.msra.mxu0 0.0
    %616 = vmatprep.subr.mxu0 0.0
    %617 = vmatpush1.msra.mxu0 0.0
    %618 = vmatprep.subr.mxu0 0.0
    %619 = vmatpush1.msra.mxu0 0.0
    %620 = vmatprep.subr.mxu0 0.0
    %621 = vmatpush1.msra.mxu0 0.0
    %622 = vmatprep.mubr.f32.mxu0 0.0
    %623 = vmatmul.mubr.f32.gmra.mrb[0].mxu0 %v534
    %v624 = vpop.f32.mrb[0].mxu0
    %v625 = vadd.f32 %v556, %v624
    %v626 = vpop.f32.mrb[0].mxu0
    %627 = vdwg.mxu0
    %v628 = vmax.f32 %v625, 0.0
    %v629 = vld [vmem:[#allocation8] sm:$0xff]
    %v630 = vld [vmem:[#allocation8 + $0x8] sm:$0xff]
    %v631 = vld [vmem:[#allocation8 + $0x10] sm:$0xff]
    %v632 = vld [vmem:[#allocation8 + $0x18] sm:$0xff]
    %v633 = vld [vmem:[#allocation8 + $0x20] sm:$0xff]
    %v634 = vld [vmem:[#allocation8 + $0x28] sm:$0xff]
    %v635 = vld [vmem:[#allocation8 + $0x30] sm:$0xff]
    %v636 = vld [vmem:[#allocation8 + $0x38] sm:$0xff]
    %v637 = vld [vmem:[#allocation8 + $0x40] sm:$0xff]
    %v638 = vld [vmem:[#allocation8 + $0x48] sm:$0xff]
    %v639 = vld [vmem:[#allocation8 + $0x50] sm:$0xff]
    %v640 = vld [vmem:[#allocation8 + $0x58] sm:$0xff]
    %v641 = vld [vmem:[#allocation8 + $0x60] sm:$0xff]
    %v642 = vld [vmem:[#allocation8 + $0x68] sm:$0xff]
    %v643 = vld [vmem:[#allocation8 + $0x70] sm:$0xff]
    %v644 = vld [vmem:[#allocation8 + $0x78] sm:$0xff]
    %v645 = vld [vmem:[%s6] sm:$0x1]
    %v647 = vlaneseq
    %v648 = vshrl.u32 %v647, 7
    %v649 = vsub.s32 0, %v648
    %v650 = vrot.slane %v645, %v649
    %652 = vmatprep.subr.mxu0 0.0
    %653 = vmatpush1.msra.mxu0 %v629
    %654 = vmatprep.subr.mxu0 0.0
    %655 = vmatpush1.msra.mxu0 %v630
    %656 = vmatprep.subr.mxu0 0.0
    %657 = vmatpush1.msra.mxu0 %v631
    %658 = vmatprep.subr.mxu0 0.0
    %659 = vmatpush1.msra.mxu0 %v632
    %660 = vmatprep.subr.mxu0 0.0
    %661 = vmatpush1.msra.mxu0 %v633
    %662 = vmatprep.subr.mxu0 0.0
    %663 = vmatpush1.msra.mxu0 %v634
    %664 = vmatprep.subr.mxu0 0.0
    %665 = vmatpush1.msra.mxu0 %v635
    %666 = vmatprep.subr.mxu0 0.0
    %667 = vmatpush1.msra.mxu0 %v636
    %668 = vmatprep.subr.mxu0 0.0
    %669 = vmatpush1.msra.mxu0 %v637
    %670 = vmatprep.subr.mxu0 0.0
    %671 = vmatpush1.msra.mxu0 %v638
    %672 = vmatprep.subr.mxu0 0.0
    %673 = vmatpush1.msra.mxu0 %v639
    %674 = vmatprep.subr.mxu0 0.0
    %675 = vmatpush1.msra.mxu0 %v640
    %676 = vmatprep.subr.mxu0 0.0
    %677 = vmatpush1.msra.mxu0 %v641
    %678 = vmatprep.subr.mxu0 0.0
    %679 = vmatpush1.msra.mxu0 %v642
    %680 = vmatprep.subr.mxu0 0.0
    %681 = vmatpush1.msra.mxu0 %v643
    %682 = vmatprep.subr.mxu0 0.0
    %683 = vmatpush1.msra.mxu0 %v644
    %684 = vmatprep.subr.mxu0 0.0
    %685 = vmatpush1.msra.mxu0 0.0
    %686 = vmatprep.subr.mxu0 0.0
    %687 = vmatpush1.msra.mxu0 0.0
    %688 = vmatprep.subr.mxu0 0.0
    %689 = vmatpush1.msra.mxu0 0.0
    %690 = vmatprep.subr.mxu0 0.0
    %691 = vmatpush1.msra.mxu0 0.0
    %692 = vmatprep.subr.mxu0 0.0
    %693 = vmatpush1.msra.mxu0 0.0
    %694 = vmatprep.subr.mxu0 0.0
    %695 = vmatpush1.msra.mxu0 0.0
    %696 = vmatprep.subr.mxu0 0.0
    %697 = vmatpush1.msra.mxu0 0.0
    %698 = vmatprep.subr.mxu0 0.0
    %699 = vmatpush1.msra.mxu0 0.0
    %700 = vmatprep.subr.mxu0 0.0
    %701 = vmatpush1.msra.mxu0 0.0
    %702 = vmatprep.subr.mxu0 0.0
    %703 = vmatpush1.msra.mxu0 0.0
    %704 = vmatprep.subr.mxu0 0.0
    %705 = vmatpush1.msra.mxu0 0.0
    %706 = vmatprep.subr.mxu0 0.0
    %707 = vmatpush1.msra.mxu0 0.0
    %708 = vmatprep.subr.mxu0 0.0
    %709 = vmatpush1.msra.mxu0 0.0
    %710 = vmatprep.subr.mxu0 0.0
    %711 = vmatpush1.msra.mxu0 0.0
    %712 = vmatprep.subr.mxu0 0.0
    %713 = vmatpush1.msra.mxu0 0.0
    %714 = vmatprep.subr.mxu0 0.0
    %715 = vmatpush1.msra.mxu0 0.0
    %716 = vmatprep.mubr.f32.mxu0 0.0
    %717 = vmatmul.mubr.f32.gmra.mrb[0].mxu0 %v628
    %v718 = vpop.f32.mrb[0].mxu0
    %v719 = vadd.f32 %v650, %v718
    %v720 = vpop.f32.mrb[0].mxu0
    %721 = vdwg.mxu0
    %722 = vst [vmem:[#allocation11] sm:$0xff] %v719
    %v723 = vld [vmem:[%s7] sm:$0xff]
    %v724 = vld [vmem:[#allocation10] sm:$0xff]
    %v725 = vld [vmem:[#allocation10 + $0x8] sm:$0xff]
    %v726 = vld [vmem:[#allocation10 + $0x10] sm:$0xff]
    %v727 = vld [vmem:[#allocation10 + $0x18] sm:$0xff]
    %v728 = vld [vmem:[#allocation10 + $0x20] sm:$0xff]
    %v729 = vld [vmem:[#allocation10 + $0x28] sm:$0xff]
    %v730 = vld [vmem:[#allocation10 + $0x30] sm:$0xff]
    %v731 = vld [vmem:[#allocation10 + $0x38] sm:$0xff]
    %v732 = vld [vmem:[#allocation10 + $0x40] sm:$0xff]
    %v733 = vld [vmem:[#allocation10 + $0x48] sm:$0xff]
    %v734 = vld [vmem:[#allocation10 + $0x50] sm:$0xff]
    %v735 = vld [vmem:[#allocation10 + $0x58] sm:$0xff]
    %v736 = vld [vmem:[#allocation10 + $0x60] sm:$0xff]
    %v737 = vld [vmem:[#allocation10 + $0x68] sm:$0xff]
    %v738 = vld [vmem:[#allocation10 + $0x70] sm:$0xff]
    %v739 = vld [vmem:[#allocation10 + $0x78] sm:$0xff]
    %v740 = vld [vmem:[%s9] sm:$0x1]
    %v742 = vlaneseq
    %v743 = vshrl.u32 %v742, 7
    %v744 = vsub.s32 0, %v743
    %v745 = vrot.slane %v740, %v744
    %747 = vmatprep.subr.mxu0 0.0
    %748 = vmatpush1.msra.mxu0 %v724
    %749 = vmatprep.subr.mxu0 0.0
    %750 = vmatpush1.msra.mxu0 %v725
    %751 = vmatprep.subr.mxu0 0.0
    %752 = vmatpush1.msra.mxu0 %v726
    %753 = vmatprep.subr.mxu0 0.0
    %754 = vmatpush1.msra.mxu0 %v727
    %755 = vmatprep.subr.mxu0 0.0
    %756 = vmatpush1.msra.mxu0 %v728
    %757 = vmatprep.subr.mxu0 0.0
    %758 = vmatpush1.msra.mxu0 %v729
    %759 = vmatprep.subr.mxu0 0.0
    %760 = vmatpush1.msra.mxu0 %v730
    %761 = vmatprep.subr.mxu0 0.0
    %762 = vmatpush1.msra.mxu0 %v731
    %763 = vmatprep.subr.mxu0 0.0
    %764 = vmatpush1.msra.mxu0 %v732
    %765 = vmatprep.subr.mxu0 0.0
    %766 = vmatpush1.msra.mxu0 %v733
    %767 = vmatprep.subr.mxu0 0.0
    %768 = vmatpush1.msra.mxu0 %v734
    %769 = vmatprep.subr.mxu0 0.0
    %770 = vmatpush1.msra.mxu0 %v735
    %771 = vmatprep.subr.mxu0 0.0
    %772 = vmatpush1.msra.mxu0 %v736
    %773 = vmatprep.subr.mxu0 0.0
    %774 = vmatpush1.msra.mxu0 %v737
    %775 = vmatprep.subr.mxu0 0.0
    %776 = vmatpush1.msra.mxu0 %v738
    %777 = vmatprep.subr.mxu0 0.0
    %778 = vmatpush1.msra.mxu0 %v739
    %779 = vmatprep.subr.mxu0 0.0
    %780 = vmatpush1.msra.mxu0 0.0
    %781 = vmatprep.subr.mxu0 0.0
    %782 = vmatpush1.msra.mxu0 0.0
    %783 = vmatprep.subr.mxu0 0.0
    %784 = vmatpush1.msra.mxu0 0.0
    %785 = vmatprep.subr.mxu0 0.0
    %786 = vmatpush1.msra.mxu0 0.0
    %787 = vmatprep.subr.mxu0 0.0
    %788 = vmatpush1.msra.mxu0 0.0
    %789 = vmatprep.subr.mxu0 0.0
    %790 = vmatpush1.msra.mxu0 0.0
    %791 = vmatprep.subr.mxu0 0.0
    %792 = vmatpush1.msra.mxu0 0.0
    %793 = vmatprep.subr.mxu0 0.0
    %794 = vmatpush1.msra.mxu0 0.0
    %795 = vmatprep.subr.mxu0 0.0
    %796 = vmatpush1.msra.mxu0 0.0
    %797 = vmatprep.subr.mxu0 0.0
    %798 = vmatpush1.msra.mxu0 0.0
    %799 = vmatprep.subr.mxu0 0.0
    %800 = vmatpush1.msra.mxu0 0.0
    %801 = vmatprep.subr.mxu0 0.0
    %802 = vmatpush1.msra.mxu0 0.0
    %803 = vmatprep.subr.mxu0 0.0
    %804 = vmatpush1.msra.mxu0 0.0
    %805 = vmatprep.subr.mxu0 0.0
    %806 = vmatpush1.msra.mxu0 0.0
    %807 = vmatprep.subr.mxu0 0.0
    %808 = vmatpush1.msra.mxu0 0.0
    %809 = vmatprep.subr.mxu0 0.0
    %810 = vmatpush1.msra.mxu0 0.0
    %811 = vmatprep.mubr.f32.mxu0 0.0
    %812 = vmatmul.mubr.f32.gmra.mrb[0].mxu0 %v723
    %v813 = vpop.f32.mrb[0].mxu0
    %v814 = vadd.f32 %v745, %v813
    %v815 = vpop.f32.mrb[0].mxu0
    %816 = vdwg.mxu0
    %817 = vst [vmem:[#allocation12] sm:$0xff] %v814
    %v818 = vld [vmem:[%s10] sm:$0xff]
    %v819 = vlaneseq
    %v820 = vand.u32 %v819, 127
    %vm821 = vcmp.lt.s32.totalorder %v820, 8
    %822 = vset.pattern.permute.xlu0 0
    %823 = vperm.xlu0 %822, %v818
    %v824 = vpop.permute.xlu0 %823
    %vm825 = vcmp.eq.s32.totalorder %v820, %v824
    %v826 = vsel %vm821, %v719, -1e+30
    %827 = vmax.xlane.f32.xlu0 %v826
    %v828 = vpop.xlane.xlu0 %827
    %v829 = vsub.f32 %v826, %v828
    %v830 = vmul.f32 %v829, 1.442695
    %v831 = vpow.pop %v830
    %832 = vadd.xlane.f32.xlu0 %v831
    %v833 = vpop.xlane.xlu0 %832
    %v834 = vlog2.pop %v833
    %v835 = vmul.f32 %v834, 0.6931472
    %v836 = vadd.f32 %v828, %v835
    %v837 = vsel %vm825, %v719, 0.0
    %838 = vadd.xlane.f32.xlu0 %v837
    %v839 = vpop.xlane.xlu0 %838
    %v840 = vsub.f32 %v836, %v839
    %841 = vst [vmem:[#allocation14] sm:$0xff] %v840
    %v842 = vsel %vm821, %v814, -1e+30
    %843 = vmax.xlane.f32.xlu0 %v842
    %v844 = vpop.xlane.xlu0 %843
    %v845 = vsub.f32 %v842, %v844
    %v846 = vmul.f32 %v845, 1.442695
    %v847 = vpow.pop %v846
    %848 = vadd.xlane.f32.xlu0 %v847
    %v849 = vpop.xlane.xlu0 %848
    %v850 = vlog2.pop %v849
    %v851 = vmul.f32 %v850, 0.6931472
    %v852 = vadd.f32 %v844, %v851
    %v853 = vsel %vm825, %v814, 0.0
    %854 = vadd.xlane.f32.xlu0 %v853
    %v855 = vpop.xlane.xlu0 %854
    %v856 = vsub.f32 %v852, %v855
    %857 = vst [vmem:[#allocation15] sm:$0xff] %v856
    // Predicated region
    $region66: #{tpu_custom_call.1} parent=1 // pred_check
      _
    $region67: #{tpu_custom_call.1} parent=1 // pred_check_branch
      %859 = sbr.rel (0) target = $region69
    $region68: #{tpu_custom_call.1} parent=1 // pred_region
      %s861 = ssub.s32 128, 128
      %862 = vsyncadd [#allocation4], %s861
      %s864 = sshll.u32 [#allocation11], 4
      %s865 = int_to_ptr.vmem [resolvable:$true] %s864
      %867 = dma.vmem_to_hbm [thread:$0]  %s865, 128, %s11, [#allocation4]
    $region69: #{tpu_custom_call.1} parent=1 // pred_fallthru
      _
    // Predicated region
    $region70: #{tpu_custom_call.1} parent=1 // pred_check
      _
    $region71: #{tpu_custom_call.1} parent=1 // pred_check_branch
      %869 = sbr.rel (0) target = $region73
    $region72: #{tpu_custom_call.1} parent=1 // pred_region
      %s871 = ssub.s32 128, 128
      %872 = vsyncadd [#allocation13], %s871
      %s874 = sshll.u32 [#allocation12], 4
      %s875 = int_to_ptr.vmem [resolvable:$true] %s874
      %877 = dma.vmem_to_hbm [thread:$0]  %s875, 128, %s12, [#allocation13]
    $region73: #{tpu_custom_call.1} parent=1 // pred_fallthru
      _
    // Predicated region
    $region74: #{tpu_custom_call.1} parent=1 // pred_check
      _
    $region75: #{tpu_custom_call.1} parent=1 // pred_check_branch
      %879 = sbr.rel (0) target = $region77
    $region76: #{tpu_custom_call.1} parent=1 // pred_region
      %s881 = ssub.s32 128, 128
      %882 = vsyncadd [#allocation13], %s881
      %s884 = sshll.u32 [#allocation14], 4
      %s885 = int_to_ptr.vmem [resolvable:$true] %s884
      %887 = dma.vmem_to_hbm [thread:$0]  %s885, 128, %s13, [#allocation13]
    $region77: #{tpu_custom_call.1} parent=1 // pred_fallthru
      _
    // Predicated region
    $region78: #{tpu_custom_call.1} parent=1 // pred_check
      _
    $region79: #{tpu_custom_call.1} parent=1 // pred_check_branch
      %889 = sbr.rel (0) target = $region81
    $region80: #{tpu_custom_call.1} parent=1 // pred_region
      %s891 = ssub.s32 128, 128
      %892 = vsyncadd [#allocation16], %s891
      %s894 = sshll.u32 [#allocation15], 4
      %s895 = int_to_ptr.vmem [resolvable:$true] %s894
      %897 = dma.vmem_to_hbm [thread:$0]  %s895, 128, %s14, [#allocation16]
    $region81: #{tpu_custom_call.1} parent=1 // pred_fallthru
      _
    // Predicated region
    $region82: #{tpu_custom_call.1} parent=1 // pred_check
      _
    $region83: #{tpu_custom_call.1} parent=1 // pred_check_branch
      %899 = sbr.rel (0) target = $region85
    $region84: #{tpu_custom_call.1} parent=1 // pred_region
      %900 = dma.done [#allocation4], 128
    $region85: #{tpu_custom_call.1} parent=1 // pred_fallthru
      _
    // Predicated region
    $region86: #{tpu_custom_call.1} parent=1 // pred_check
      _
    $region87: #{tpu_custom_call.1} parent=1 // pred_check_branch
      %902 = sbr.rel (0) target = $region89
    $region88: #{tpu_custom_call.1} parent=1 // pred_region
      %903 = dma.done [#allocation13], 128
    $region89: #{tpu_custom_call.1} parent=1 // pred_fallthru
      _
    // Predicated region
    $region90: #{tpu_custom_call.1} parent=1 // pred_check
      _
    $region91: #{tpu_custom_call.1} parent=1 // pred_check_branch
      %905 = sbr.rel (0) target = $region93
    $region92: #{tpu_custom_call.1} parent=1 // pred_region
      %906 = dma.done [#allocation13], 128
    $region93: #{tpu_custom_call.1} parent=1 // pred_fallthru
      _
    // Predicated region
    $region94: #{tpu_custom_call.1} parent=1 // pred_check
      _
    $region95: #{tpu_custom_call.1} parent=1 // pred_check_branch
      %908 = sbr.rel (0) target = $region97
    $region96: #{tpu_custom_call.1} parent=1 // pred_region
      %909 = dma.done [#allocation16], 128
    $region97: #{tpu_custom_call.1} parent=1 // pred_fallthru
      _
    %910 = vsyncpa [#allocation3], 1
    %911 = vsyncpa [#allocation6], 1
    %912 = vsyncpa [#allocation9], 1
    %913 = vsyncpa [#allocation4], 1
    %914 = vsyncpa [#allocation13], 1
    %915 = vsyncpa [#allocation16], 1

</llo_original>
